<compile_context>
chip_gen: v7x
topology: tpu7x:2x2x1
jax: 0.10.0
libtpu: 0.0.40
codegen_flags: <defaults>
</compile_context>

<pallas_src>
import functools

import jax
import jax.numpy as jnp
from jax import lax
from jax.experimental import pallas as pl
from jax.experimental.pallas import tpu as pltpu


def _fused_kernel(needs_mask, hw_valid, write_feats, *refs):
    """Grid = (split, batch, spatial-tile).  One image-split per (s, b)."""
    if write_feats:
        x_ref, wbb_t_ref, bbb_ref, wcls_t_ref, feats_ref, part_ref = refs
    else:
        x_ref, wbb_t_ref, bbb_ref, wcls_t_ref, part_ref = refs
        feats_ref = None

    r = pl.program_id(2)

    # Backbone stub: 1x1 conv over channels, channel-first layout.
    #   (F, Cin) @ (Cin, TILE_HW) -> (F, TILE_HW); spatial on lanes.
    y = jnp.dot(wbb_t_ref[...], x_ref[...], preferred_element_type=jnp.float32)
    y = jnp.maximum(y + bbb_ref[...], 0.0)            # bias (F,1) bcast + ReLU

    if write_feats:
        feats_ref[...] = y.astype(feats_ref.dtype)    # lane-dense store

    # Fused head: classifier applied before the spatial reduction,
    #   sum_hw (Wcls^T @ feats[:, hw]) == Wcls^T @ (sum_hw feats[:, hw]).
    z = jnp.dot(wcls_t_ref[...], y, preferred_element_type=jnp.float32)  # (C,T)

    if needs_mask:
        # Zero out contributions from the zero-padded spatial columns.
        tile_hw = z.shape[1]
        col0 = (pl.program_id(0) * pl.num_programs(2) + r) * tile_hw
        col = col0 + lax.broadcasted_iota(jnp.int32, (1, tile_hw), 1)
        z = jnp.where(col < hw_valid, z, 0.0)

    partial = jnp.sum(z, axis=1, keepdims=True)       # (C, 1)

    # Canonical accumulator: the (C,1) partial-logits block stays resident in
    # VMEM across the (arbitrary) r axis; init at r==0, unconditional +=.
    @pl.when(r == 0)
    def _():
        part_ref[...] = jnp.zeros_like(part_ref)

    part_ref[...] += partial


def _vmem_limit_bytes():
    """Per-generation scoped-VMEM limit: <=48 MiB on v7x (64 MiB physical),
    up to 96 MiB on v5e/v6e (128 MiB physical)."""
    cap = 64 * 1024 * 1024  # conservative fallback (v7x)
    try:
        info = pltpu.get_tpu_info()
        cap = int(getattr(info, "vmem_capacity_bytes", cap) or cap)
    except Exception:
        pass
    return min((cap * 3) // 4, 96 * 1024 * 1024)


def _pick_tile_hw(seg_hw, cin, n_features, feats_itemsize, vmem_limit):
    """Largest multiple-of-128 lane tile that divides `seg_hw` and keeps the
    double-buffered x + feats tiles within ~60% of the VMEM limit."""
    budget = int(vmem_limit * 0.6)
    per_lane = 2 * cin * 4 + 2 * n_features * max(feats_itemsize, 0)
    per_lane = max(per_lane, 1)
    max_tile = max(128, (budget // per_lane) // 128 * 128)
    t = min(seg_hw, max_tile)
    t -= t % 128
    while t > 128 and seg_hw % t != 0:
        t -= 128
    return max(t, 128)


class CassvaImgClassifierPallas:
    """Synthetic, deterministic-weight version of CassvaImgClassifier."""

    def __init__(self, in_chans, n_features, n_class, key):
        k1, k2, k3, k4 = jax.random.split(key, 4)
        # backbone stub: 1x1 conv weights (Cin, F) + bias (1, F)
        self.w_bb = (jax.random.normal(k1, (in_chans, n_features), jnp.float32)
                     * (1.0 / jnp.sqrt(in_chans)))
        self.b_bb = jax.random.normal(k2, (1, n_features), jnp.float32) * 0.01
        # classifier: Linear(n_features, n_class)
        self.w_cls = (jax.random.normal(k3, (n_features, n_class), jnp.float32)
                      * (1.0 / jnp.sqrt(n_features)))
        self.b_cls = jax.random.normal(k4, (1, n_class), jnp.float32) * 0.01
        # kernel-layout (channel-first) copies, transposed once at init
        self.w_bb_t = jnp.transpose(self.w_bb)      # (F, Cin)
        self.b_bb_col = jnp.transpose(self.b_bb)    # (F, 1)
        self.w_cls_t = jnp.transpose(self.w_cls)    # (C, F)
        self.n_features = n_features
        self.n_class = n_class

    def __call__(self, x_nchw, tile_hw=None, return_feats=True,
                 feats_dtype=jnp.float32):
        B, Cin, H, W = x_nchw.shape
        F = self.n_features
        C = self.n_class
        HW = H * W

        # Pad HW up to a multiple of 128 (lane-dense tiles, no full-HW
        # fallback); the kernel masks the padded columns out of the pool.
        HW_pad = -(-HW // 128) * 128
        needs_mask = HW_pad != HW

        # NCHW -> (B, Cin, HW): contiguous reshape, no transpose.
        x3 = x_nchw.reshape(B, Cin, HW)
        if needs_mask:
            x3 = jnp.pad(x3, ((0, 0), (0, 0), (0, HW_pad - HW)))

        # v7x: batch is the only parallel work unit; for odd/small B split the
        # spatial extent in two so both TensorCores have work.
        nsplit = 2 if (B % 2 != 0) and ((HW_pad // 128) % 2 == 0) else 1
        seg = HW_pad // nsplit

        vmem_limit = _vmem_limit_bytes()
        feats_itemsize = jnp.dtype(feats_dtype).itemsize if return_feats else 0
        if tile_hw is None:
            tile_hw = _pick_tile_hw(seg, Cin, F, feats_itemsize, vmem_limit)
        assert seg % tile_hw == 0 and tile_hw % 128 == 0
        nr = seg // tile_hw

        cost = pl.CostEstimate(
            flops=2 * B * HW_pad * Cin * F + 2 * B * HW_pad * F * C,
            transcendentals=0,
            bytes_accessed=(4 * B * HW_pad * Cin
                            + feats_itemsize * B * HW_pad * F
                            + 4 * (Cin * F + F + F * C)
                            + 4 * nsplit * B * C),
        )

        part_sds = jax.ShapeDtypeStruct((nsplit, B, C, 1), jnp.float32)
        part_spec = pl.BlockSpec((pl.Squeezed(), pl.Squeezed(), C, 1),
                                 lambda s, b, r: (s, b, 0, 0))
        if return_feats:
            feats_sds = jax.ShapeDtypeStruct((B, F, HW_pad), feats_dtype)
            feats_spec = pl.BlockSpec((pl.Squeezed(), F, tile_hw),
                                      lambda s, b, r: (b, 0, s * nr + r))
            out_shape = (feats_sds, part_sds)
            out_specs = (feats_spec, part_spec)
        else:
            out_shape = (part_sds,)
            out_specs = (part_spec,)

        outs = pl.pallas_call(
            functools.partial(_fused_kernel, needs_mask, HW, return_feats),
            out_shape=out_shape,
            grid_spec=pltpu.PrefetchScalarGridSpec(
                num_scalar_prefetch=0,
                grid=(nsplit, B, nr),
                in_specs=[
                    pl.BlockSpec((pl.Squeezed(), Cin, tile_hw),
                                 lambda s, b, r: (b, 0, s * nr + r)),
                    pl.BlockSpec((F, Cin), lambda s, b, r: (0, 0)),
                    pl.BlockSpec((F, 1), lambda s, b, r: (0, 0)),
                    pl.BlockSpec((C, F), lambda s, b, r: (0, 0)),
                ],
                out_specs=out_specs,
            ),
            compiler_params=pltpu.CompilerParams(
                dimension_semantics=("parallel", "parallel", "arbitrary"),
                vmem_limit_bytes=vmem_limit,
            ),
            cost_estimate=cost,
        )(x3, self.w_bb_t, self.b_bb_col, self.w_cls_t)

        if return_feats:
            feats_pad, partials = outs
        else:
            (partials,) = outs

        # Finalize the fused head on the tiny (nsplit, B, C, 1) partials:
        # sum splits == AdaptiveAvgPool2d sum; then * 1/HW and + bias.
        logits = partials.sum(axis=0)[:, :, 0] * (1.0 / float(HW)) + self.b_cls

        if return_feats:
            feats = feats_pad[:, :, :HW].reshape(B, F, H, W)  # channel-first
            return logits, feats
        return logits


def _reference(model, x_nchw):
    # Pure-JAX reference (PyTorch-style channel-last math).
    B, Cin, H, W = x_nchw.shape
    x2d = jnp.transpose(x_nchw, (0, 2, 3, 1)).reshape(B * H * W, Cin)
    feats2d = jnp.maximum(x2d @ model.w_bb + model.b_bb, 0.0)
    feats = feats2d.reshape(B, H * W, model.n_features)
    pooled = feats.mean(axis=1)
    logits = pooled @ model.w_cls + model.b_cls
    feats_nchw = jnp.transpose(
        feats.reshape(B, H, W, model.n_features), (0, 3, 1, 2))
    return logits, feats_nchw


if __name__ == "__main__":
    key = jax.random.PRNGKey(0)
    kx, kp, kx2 = jax.random.split(key, 3)

    B, Cin, H, W = 2, 4, 16, 16     # small synthetic shapes
    n_features, n_class = 32, 5

    x = jax.random.normal(kx, (B, Cin, H, W), jnp.float32)
    model = CassvaImgClassifierPallas(Cin, n_features, n_class, kp)
    ref_logits, ref_feats = _reference(model, x)

    # 1) Default path: auto (VMEM-derived) tile, f32 feats.
    logits, feats = model(x)
    jax.block_until_ready(logits)
    jax.block_until_ready(feats)
    assert logits.shape == (B, n_class)
    assert feats.shape == (B, n_features, H, W)
    assert jnp.allclose(logits, ref_logits, atol=1e-4, rtol=1e-4)
    assert jnp.allclose(feats, ref_feats, atol=1e-4, rtol=1e-4)

    # 2) Forced small tile -> exercises the multi-tile pooled accumulator.
    logits2, feats2 = model(x, tile_hw=128)
    assert jnp.allclose(logits2, ref_logits, atol=1e-4, rtol=1e-4)
    assert jnp.allclose(feats2, ref_feats, atol=1e-4, rtol=1e-4)

    # 3) B=1 -> exercises the dual-TensorCore spatial split (nsplit=2).
    logits3, feats3 = model(x[:1])
    r_l3, r_f3 = _reference(model, x[:1])
    assert jnp.allclose(logits3, r_l3, atol=1e-4, rtol=1e-4)
    assert jnp.allclose(feats3, r_f3, atol=1e-4, rtol=1e-4)

    # 4) Logits-only path (feats not materialized -> ~8-9x less HBM traffic).
    logits4 = model(x, return_feats=False)
    assert jnp.allclose(logits4, ref_logits, atol=1e-4, rtol=1e-4)

    # 5) bf16 feats path (compute f32, cast on store); logits stay f32-exact.
    logits5, feats5 = model(x, feats_dtype=jnp.bfloat16)
    assert feats5.dtype == jnp.bfloat16
    assert jnp.allclose(logits5, ref_logits, atol=1e-4, rtol=1e-4)
    assert jnp.allclose(feats5.astype(jnp.float32), ref_feats,
                        atol=5e-2, rtol=5e-2)

    # 6) Non-128-aligned spatial size -> exercises the pad+mask fallback.
    x6 = jax.random.normal(kx2, (B, Cin, 12, 12), jnp.float32)
    logits6, feats6 = model(x6)
    r_l6, r_f6 = _reference(model, x6)
    assert feats6.shape == (B, n_features, 12, 12)
    assert jnp.allclose(logits6, r_l6, atol=1e-4, rtol=1e-4)
    assert jnp.allclose(feats6, r_f6, atol=1e-4, rtol=1e-4)

    print("KERNEL_OK")
</pallas_src>

<mosaic_0001>
module attributes {stable_mosaic.version = 11 : i64} {
  func.func @_fused_kernel(%arg0: i32, %arg1: i32, %arg2: i32, %arg3: memref<1x4x256xf32, #tpu.memory_space<vmem>>, %arg4: memref<32x4xf32, #tpu.memory_space<vmem>>, %arg5: memref<32x1xf32, #tpu.memory_space<vmem>>, %arg6: memref<5x32xf32, #tpu.memory_space<vmem>>, %arg7: memref<1x32x256xf32, #tpu.memory_space<vmem>>, %arg8: memref<1x1x5x1xf32, #tpu.memory_space<vmem>>) attributes {dimension_semantics = [#tpu.dimension_semantics<parallel>, #tpu.dimension_semantics<parallel>, #tpu.dimension_semantics<arbitrary>], iteration_bounds = array<i64: 1, 2, 1>, scalar_prefetch = 0 : i64, scratch_operands = 0 : i64, tpu.core_type = #tpu.core_type<tc>, window_params = [{transform_indices = @transform_0, window_bounds = array<i64: 1, 4, 256>}, {pipeline_mode = #tpu.pipeline_mode<synchronous>, transform_indices = @transform_1, window_bounds = array<i64: 32, 4>}, {pipeline_mode = #tpu.pipeline_mode<synchronous>, transform_indices = @transform_2, window_bounds = array<i64: 32, 1>}, {pipeline_mode = #tpu.pipeline_mode<synchronous>, transform_indices = @transform_3, window_bounds = array<i64: 5, 32>}, {transform_indices = @transform_4, window_bounds = array<i64: 1, 32, 256>}, {transform_indices = @transform_5, window_bounds = array<i64: 1, 1, 5, 1>}]} {
    %c0 = arith.constant 0 : index
    %c0_0 = arith.constant 0 : index
    %0 = vector.load %arg4[%c0, %c0_0] : memref<32x4xf32, #tpu.memory_space<vmem>>, vector<32x4xf32>
    %c0_1 = arith.constant 0 : index
    %c0_2 = arith.constant 0 : index
    %c0_3 = arith.constant 0 : index
    %1 = vector.load %arg3[%c0_1, %c0_2, %c0_3] : memref<1x4x256xf32, #tpu.memory_space<vmem>>, vector<1x4x256xf32>
    %2 = vector.shape_cast %1 : vector<1x4x256xf32> to vector<4x256xf32>
    %cst = arith.constant dense<0.000000e+00> : vector<32x256xf32>
    %3 = tpu.matmul %0, %2, %cst {dimension_numbers = #tpu.dot_dimension_numbers<[1], [0], [0], [1], [0, 0, 1, 1], [], []>} : vector<32x4xf32>, vector<4x256xf32>, vector<32x256xf32> -> vector<32x256xf32>
    %c0_4 = arith.constant 0 : index
    %c0_5 = arith.constant 0 : index
    %4 = vector.load %arg5[%c0_4, %c0_5] : memref<32x1xf32, #tpu.memory_space<vmem>>, vector<32x1xf32>
    %5 = vector.broadcast %4 : vector<32x1xf32> to vector<32x256xf32>
    %6 = arith.addf %3, %5 : vector<32x256xf32>
    %cst_6 = arith.constant 0.000000e+00 : f32
    %7 = vector.broadcast %cst_6 : f32 to vector<32x256xf32>
    %8 = arith.maximumf %6, %7 : vector<32x256xf32>
    %c0_7 = arith.constant 0 : index
    %c0_8 = arith.constant 0 : index
    %c0_9 = arith.constant 0 : index
    %9 = vector.load %arg7[%c0_7, %c0_8, %c0_9] : memref<1x32x256xf32, #tpu.memory_space<vmem>>, vector<1x32x256xf32>
    %10 = vector.shape_cast %9 : vector<1x32x256xf32> to vector<32x256xf32>
    %11 = vector.shape_cast %8 : vector<32x256xf32> to vector<1x32x256xf32>
    tpu.vector_store %arg7[%c0_7, %c0_8, %c0_9], %11 {strides = array<i32>} : memref<1x32x256xf32, #tpu.memory_space<vmem>>, vector<1x32x256xf32>,
    %c0_10 = arith.constant 0 : index
    %c0_11 = arith.constant 0 : index
    %12 = vector.load %arg6[%c0_10, %c0_11] : memref<5x32xf32, #tpu.memory_space<vmem>>, vector<5x32xf32>
    %cst_12 = arith.constant dense<0.000000e+00> : vector<5x256xf32>
    %13 = tpu.matmul %12, %8, %cst_12 {dimension_numbers = #tpu.dot_dimension_numbers<[1], [0], [0], [1], [0, 0, 1, 1], [], []>} : vector<5x32xf32>, vector<32x256xf32>, vector<5x256xf32> -> vector<5x256xf32>
    %cst_13 = arith.constant dense<0.000000e+00> : vector<5xf32>
    %14 = vector.multi_reduction <add>, %13, %cst_13 [1] : vector<5x256xf32> to vector<5xf32>
    %15 = vector.shape_cast %14 : vector<5xf32> to vector<5x1xf32>
    %c0_i32 = arith.constant 0 : i32
    %16 = arith.cmpi eq, %arg2, %c0_i32 : i32
    %17 = arith.extui %16 : i1 to i32
    %c0_i32_14 = arith.constant 0 : i32
    %18 = arith.cmpi ne, %17, %c0_i32_14 : i32
    scf.if %18 {
      %cst_23 = arith.constant 0.000000e+00 : f32
      %25 = vector.broadcast %cst_23 : f32 to vector<5x1xf32>
      %c0_24 = arith.constant 0 : index
      %c0_25 = arith.constant 0 : index
      %c0_26 = arith.constant 0 : index
      %c0_27 = arith.constant 0 : index
      %26 = vector.load %arg8[%c0_24, %c0_25, %c0_26, %c0_27] : memref<1x1x5x1xf32, #tpu.memory_space<vmem>>, vector<1x1x5x1xf32>
      %27 = vector.shape_cast %26 : vector<1x1x5x1xf32> to vector<5x1xf32>
      %28 = vector.shape_cast %25 : vector<5x1xf32> to vector<1x1x5x1xf32>
      tpu.vector_store %arg8[%c0_24, %c0_25, %c0_26, %c0_27], %28 {strides = array<i32>} : memref<1x1x5x1xf32, #tpu.memory_space<vmem>>, vector<1x1x5x1xf32>,
    } else {
    }
    %c0_15 = arith.constant 0 : index
    %c0_16 = arith.constant 0 : index
    %c0_17 = arith.constant 0 : index
    %c0_18 = arith.constant 0 : index
    %19 = vector.load %arg8[%c0_15, %c0_16, %c0_17, %c0_18] : memref<1x1x5x1xf32, #tpu.memory_space<vmem>>, vector<1x1x5x1xf32>
    %20 = vector.shape_cast %19 : vector<1x1x5x1xf32> to vector<5x1xf32>
    %21 = arith.addf %20, %15 : vector<5x1xf32>
    %c0_19 = arith.constant 0 : index
    %c0_20 = arith.constant 0 : index
    %c0_21 = arith.constant 0 : index
    %c0_22 = arith.constant 0 : index
    %22 = vector.load %arg8[%c0_19, %c0_20, %c0_21, %c0_22] : memref<1x1x5x1xf32, #tpu.memory_space<vmem>>, vector<1x1x5x1xf32>
    %23 = vector.shape_cast %22 : vector<1x1x5x1xf32> to vector<5x1xf32>
    %24 = vector.shape_cast %21 : vector<5x1xf32> to vector<1x1x5x1xf32>
    tpu.vector_store %arg8[%c0_19, %c0_20, %c0_21, %c0_22], %24 {strides = array<i32>} : memref<1x1x5x1xf32, #tpu.memory_space<vmem>>, vector<1x1x5x1xf32>,
    return
  }
  func.func @transform_0(%arg0: i32, %arg1: i32, %arg2: i32) -> (i32, i32, i32) {
    %c1_i32 = arith.constant 1 : i32
    %0 = arith.muli %arg0, %c1_i32 : i32
    %1 = arith.addi %0, %arg2 : i32
    %c0_i32 = arith.constant 0 : i32
    %c0_i32_0 = arith.constant 0 : i32
    return %arg1, %c0_i32, %1 : i32, i32, i32
  }
  func.func @transform_1(%arg0: i32, %arg1: i32, %arg2: i32) -> (i32, i32) {
    %c0_i32 = arith.constant 0 : i32
    %c0_i32_0 = arith.constant 0 : i32
    %c0_i32_1 = arith.constant 0 : i32
    return %c0_i32, %c0_i32_0 : i32, i32
  }
  func.func @transform_2(%arg0: i32, %arg1: i32, %arg2: i32) -> (i32, i32) {
    %c0_i32 = arith.constant 0 : i32
    %c0_i32_0 = arith.constant 0 : i32
    %c0_i32_1 = arith.constant 0 : i32
    return %c0_i32, %c0_i32_0 : i32, i32
  }
  func.func @transform_3(%arg0: i32, %arg1: i32, %arg2: i32) -> (i32, i32) {
    %c0_i32 = arith.constant 0 : i32
    %c0_i32_0 = arith.constant 0 : i32
    %c0_i32_1 = arith.constant 0 : i32
    return %c0_i32, %c0_i32_0 : i32, i32
  }
  func.func @transform_4(%arg0: i32, %arg1: i32, %arg2: i32) -> (i32, i32, i32) {
    %c1_i32 = arith.constant 1 : i32
    %0 = arith.muli %arg0, %c1_i32 : i32
    %1 = arith.addi %0, %arg2 : i32
    %c0_i32 = arith.constant 0 : i32
    %c0_i32_0 = arith.constant 0 : i32
    return %arg1, %c0_i32, %1 : i32, i32, i32
  }
  func.func @transform_5(%arg0: i32, %arg1: i32, %arg2: i32) -> (i32, i32, i32, i32) {
    %c0_i32 = arith.constant 0 : i32
    %c0_i32_0 = arith.constant 0 : i32
    %c0_i32_1 = arith.constant 0 : i32
    return %arg0, %arg1, %c0_i32, %c0_i32_0 : i32, i32, i32, i32
  }
}

</mosaic_0001>

<llo_original>
// kernel: tpu_custom_call.1
$region0: #{tpu_custom_call.1}
  #allocation0 [shape = 'u32[]', space=smem, size = 0x4, offset = 0x4, fixed_abs, tag = 'smem constant byte address 0x4 - core index']
  #allocation1 [shape = 'u32[144,128]{1,0:T(1,128)}', space=vmem, size = 0x12000, scoped, tag = 'internal scratch']
  %s0 = inlined_call_operand.vmem [shape: f32[2,4,256], index: 0, kind: input, shape index: {}]
  %s1 = inlined_call_operand.vmem [shape: f32[32,4], index: 1, kind: input, shape index: {}]
  %s2 = inlined_call_operand.vmem [shape: f32[32,1], index: 2, kind: input, shape index: {}]
  %s3 = inlined_call_operand.vmem [shape: f32[5,32], index: 3, kind: input, shape index: {}]
  %s4 = inlined_call_operand.hbm [shape: f32[2,32,256], index: 4, kind: output, shape index: {0}]
  %s5 = inlined_call_operand.vmem [shape: f32[1,2,5,1], index: 5, kind: output, shape index: {1}]
  %6 = xla_tuple %s4, %s5
  %s7 = sld [smem:[#allocation0]]
  $region61: #{tpu_custom_call.1} parent=0
    _
  %s9 = ssub.s32 1, %s7
  %s10 = scalar_select 0, %s9, %s7
  $region1: #{tpu_custom_call.1} parent=0
    #allocation2 [shape = 'u8[65536]{0}', space=vmem, size = 0x10000, scoped, tag = 'output window, operand 0']
    #allocation3 [shape = 's32[2]{0}', space=sflag, size = 0x8, scoped, tag = 'scoped memory for tpu_custom_call.1']
    %11 = vsyncpa [#allocation3], 0
    %s12 = scalar_lea.sflag [#allocation3], 1
    %13 = vsyncpa %s12, 0
    loop: start=0, step=1, limit=4
    $region2: #{tpu_custom_call.1} parent=1 // loop_pre_header
      _
    $region3: #{tpu_custom_call.1} parent=1 // loop_header
      %s15 = sphi 0, %s19
      %p16 = scmp.ge.s32.totalorder %s15, 4
      %s22 = sphi 0, %s41
      %s23 = sphi 0, %s37
      %s24 = sphi 0, %s33
      %s25 = sphi 0, %s22
      %s26 = sphi 0, %s23
      %s27 = sphi 0, %s24
      %s28 = sphi 0, %s25
      %s29 = sphi 0, %s26
      %s30 = sphi 0, %s27
      %s48 = sphi 0, %s50
      %s51 = sphi 0, %s48
      %s52 = sphi 0, %s51
      %s68 = sphi 0, %s52
      %s72 = sphi 0, %s72
      %s74 = sphi 0, %s72
      %s75 = sphi 0, %s74
      %s89 = sphi 0, %s75
      %s93 = sphi 0, %s93
      %s95 = sphi 0, %s93
      %s96 = sphi 0, %s95
      %s110 = sphi 0, %s96
      %s114 = sphi 0, %s114
      %s116 = sphi 0, %s114
      %s117 = sphi 0, %s116
      %s131 = sphi 0, %s117
      %s141 = sphi 0, %s143
      %s144 = sphi 0, %s141
      %s145 = sphi 0, %s144
      %s161 = sphi 0, %s145
      %s169 = sphi 0, %s171
      %s172 = sphi 0, %s169
      %s173 = sphi 0, %s172
      %s189 = sphi 0, %s173
    $region4: #{tpu_custom_call.1} parent=1 // loop_header_branch
      %18 = sbr.rel (%p16) target = $region8
    $region5: #{tpu_custom_call.1} parent=1 // loop_body
      %s20 = ssub.s32 %s15, 1
      %s21 = ssub.s32 %s15, 2
      %s31 = sadd.s32 1, %s24
      %p32 = scmp.ge.s32.totalorder %s31, 1
      %s33 = scalar_select %p32, 0, %s31
      %s34 = sadd.s32 1, %s23
      %s35 = scalar_select %p32, %s34, %s23
      %p36 = scmp.ge.s32.totalorder %s35, 2
      %s37 = scalar_select %p36, 0, %s35
      %s38 = sadd.s32 1, %s22
      %s39 = scalar_select %p36, %s38, %s22
      %p40 = scmp.ge.s32.totalorder %s39, 1
      %s41 = scalar_select %p40, 0, %s39
      %s42 = sadd.s32 %s22, %s24
      %s43 = sadd.s32 %s41, %s33
      %s44 = ssub.s32 %s23, %s37
      %s45 = ssub.s32 %s42, %s43
      %s46 = sor.u32 %s44, %s45
      %p47 = scmp.eq.s32.totalorder %s46, 0
      %s49 = sadd.s32 %s48, 1
      %s50 = scalar_select %p47, %s48, %s49
      %p53 = pneg %p47
      %p54 = scmp.eq.s32.totalorder %s15, 1
      %p55 = por %p53, %p54
      %p56 = scmp.ne.s32.totalorder %s48, %s51
      %p57 = scmp.eq.s32.totalorder %s15, 0
      %p58 = por %p56, %p57
      %p59 = scmp.ne.s32.totalorder %s48, %s51
      %p60 = scmp.eq.s32.totalorder %s20, 1
      %p61 = por %p59, %p60
      %p62 = scmp.ne.s32.totalorder %s51, %s52
      %p63 = scmp.eq.s32.totalorder %s20, 0
      %p64 = por %p62, %p63
      %p65 = scmp.ne.s32.totalorder %s51, %s52
      %p66 = scmp.eq.s32.totalorder %s21, 1
      %p67 = por %p65, %p66
      %p69 = scmp.ne.s32.totalorder %s52, %s68
      %p70 = scmp.eq.s32.totalorder %s21, 0
      %p71 = por %p69, %p70
      %s73 = sadd.s32 %s72, 1
      %p76 = scmp.eq.s32.totalorder %s15, 1
      %p77 = scmp.ne.s32.totalorder %s72, %s74
      %p78 = scmp.eq.s32.totalorder %s15, 0
      %p79 = por %p77, %p78
      %p80 = scmp.ne.s32.totalorder %s72, %s74
      %p81 = scmp.eq.s32.totalorder %s20, 1
      %p82 = por %p80, %p81
      %p83 = scmp.ne.s32.totalorder %s74, %s75
      %p84 = scmp.eq.s32.totalorder %s20, 0
      %p85 = por %p83, %p84
      %p86 = scmp.ne.s32.totalorder %s74, %s75
      %p87 = scmp.eq.s32.totalorder %s21, 1
      %p88 = por %p86, %p87
      %p90 = scmp.ne.s32.totalorder %s75, %s89
      %p91 = scmp.eq.s32.totalorder %s21, 0
      %p92 = por %p90, %p91
      %s94 = sadd.s32 %s93, 1
      %p97 = scmp.eq.s32.totalorder %s15, 1
      %p98 = scmp.ne.s32.totalorder %s93, %s95
      %p99 = scmp.eq.s32.totalorder %s15, 0
      %p100 = por %p98, %p99
      %p101 = scmp.ne.s32.totalorder %s93, %s95
      %p102 = scmp.eq.s32.totalorder %s20, 1
      %p103 = por %p101, %p102
      %p104 = scmp.ne.s32.totalorder %s95, %s96
      %p105 = scmp.eq.s32.totalorder %s20, 0
      %p106 = por %p104, %p105
      %p107 = scmp.ne.s32.totalorder %s95, %s96
      %p108 = scmp.eq.s32.totalorder %s21, 1
      %p109 = por %p107, %p108
      %p111 = scmp.ne.s32.totalorder %s96, %s110
      %p112 = scmp.eq.s32.totalorder %s21, 0
      %p113 = por %p111, %p112
      %s115 = sadd.s32 %s114, 1
      %p118 = scmp.eq.s32.totalorder %s15, 1
      %p119 = scmp.ne.s32.totalorder %s114, %s116
      %p120 = scmp.eq.s32.totalorder %s15, 0
      %p121 = por %p119, %p120
      %p122 = scmp.ne.s32.totalorder %s114, %s116
      %p123 = scmp.eq.s32.totalorder %s20, 1
      %p124 = por %p122, %p123
      %p125 = scmp.ne.s32.totalorder %s116, %s117
      %p126 = scmp.eq.s32.totalorder %s20, 0
      %p127 = por %p125, %p126
      %p128 = scmp.ne.s32.totalorder %s116, %s117
      %p129 = scmp.eq.s32.totalorder %s21, 1
      %p130 = por %p128, %p129
      %p132 = scmp.ne.s32.totalorder %s117, %s131
      %p133 = scmp.eq.s32.totalorder %s21, 0
      %p134 = por %p132, %p133
      %s135 = sadd.s32 %s22, %s24
      %s136 = sadd.s32 %s41, %s33
      %s137 = ssub.s32 %s23, %s37
      %s138 = ssub.s32 %s135, %s136
      %s139 = sor.u32 %s137, %s138
      %p140 = scmp.eq.s32.totalorder %s139, 0
      %s142 = sadd.s32 %s141, 1
      %s143 = scalar_select %p140, %s141, %s142
      %p146 = pneg %p140
      %p147 = scmp.eq.s32.totalorder %s15, 1
      %p148 = por %p146, %p147
      %p149 = scmp.ne.s32.totalorder %s141, %s144
      %p150 = scmp.eq.s32.totalorder %s15, 0
      %p151 = por %p149, %p150
      %p152 = scmp.ne.s32.totalorder %s141, %s144
      %p153 = scmp.eq.s32.totalorder %s20, 1
      %p154 = por %p152, %p153
      %p155 = scmp.ne.s32.totalorder %s144, %s145
      %p156 = scmp.eq.s32.totalorder %s20, 0
      %p157 = por %p155, %p156
      %p158 = scmp.ne.s32.totalorder %s144, %s145
      %p159 = scmp.eq.s32.totalorder %s21, 1
      %p160 = por %p158, %p159
      %p162 = scmp.ne.s32.totalorder %s145, %s161
      %p163 = scmp.eq.s32.totalorder %s21, 0
      %p164 = por %p162, %p163
      %s165 = ssub.s32 %s22, %s41
      %s166 = ssub.s32 %s23, %s37
      %s167 = sor.u32 %s165, %s166
      %p168 = scmp.eq.s32.totalorder %s167, 0
      %s170 = sadd.s32 %s169, 1
      %s171 = scalar_select %p168, %s169, %s170
      %p174 = pneg %p168
      %p175 = scmp.eq.s32.totalorder %s15, 1
      %p176 = por %p174, %p175
      %p177 = scmp.ne.s32.totalorder %s169, %s172
      %p178 = scmp.eq.s32.totalorder %s15, 0
      %p179 = por %p177, %p178
      %p180 = scmp.ne.s32.totalorder %s169, %s172
      %p181 = scmp.eq.s32.totalorder %s20, 1
      %p182 = por %p180, %p181
      %p183 = scmp.ne.s32.totalorder %s172, %s173
      %p184 = scmp.eq.s32.totalorder %s20, 0
      %p185 = por %p183, %p184
      %p186 = scmp.ne.s32.totalorder %s172, %s173
      %p187 = scmp.eq.s32.totalorder %s21, 1
      %p188 = por %p186, %p187
      %p190 = scmp.ne.s32.totalorder %s173, %s189
      %p191 = scmp.eq.s32.totalorder %s21, 0
      %p192 = por %p190, %p191
      %p193 = scmp.le.s32.totalorder 1, %s15
      %p194 = scmp.lt.s32.totalorder %s15, 3
      %p195 = pnand %p193, %p194
      %p196 = pneg %p195
      // Predicated region
      $region9: #{tpu_custom_call.1} parent=5 // pred_check
        _
      $region10: #{tpu_custom_call.1} parent=5 // pred_check_branch
        %198 = sbr.rel (%p195) target = $region12
      $region11: #{tpu_custom_call.1} parent=5 // pred_region
        %s199 = ssub.s32 %s15, 1
        // Predicated region
        $region13: #{tpu_custom_call.1} parent=11 // pred_check
          %p200 = pneg %p85
        $region14: #{tpu_custom_call.1} parent=11 // pred_check_branch
          %202 = sbr.rel (%p200) target = $region16
        $region15: #{tpu_custom_call.1} parent=11 // pred_region
          _
        $region16: #{tpu_custom_call.1} parent=11 // pred_fallthru
          _
        // Predicated region
        $region17: #{tpu_custom_call.1} parent=11 // pred_check
          %p203 = pneg %p106
        $region18: #{tpu_custom_call.1} parent=11 // pred_check_branch
          %205 = sbr.rel (%p203) target = $region20
        $region19: #{tpu_custom_call.1} parent=11 // pred_region
          _
        $region20: #{tpu_custom_call.1} parent=11 // pred_fallthru
          _
        // Predicated region
        $region21: #{tpu_custom_call.1} parent=11 // pred_check
          %p206 = pneg %p127
        $region22: #{tpu_custom_call.1} parent=11 // pred_check_branch
          %208 = sbr.rel (%p206) target = $region24
        $region23: #{tpu_custom_call.1} parent=11 // pred_region
          _
        $region24: #{tpu_custom_call.1} parent=11 // pred_fallthru
          _
      $region12: #{tpu_custom_call.1} parent=5 // pred_fallthru
        _
      %p209 = scmp.lt.s32.totalorder %s15, 2
      // Predicated region
      $region25: #{tpu_custom_call.1} parent=5 // pred_check
        %p210 = pneg %p209
      $region26: #{tpu_custom_call.1} parent=5 // pred_check_branch
        %212 = sbr.rel (%p210) target = $region28
      $region27: #{tpu_custom_call.1} parent=5 // pred_region
        // Predicated region
        $region29: #{tpu_custom_call.1} parent=27 // pred_check
          %p213 = pneg %p58
        $region30: #{tpu_custom_call.1} parent=27 // pred_check_branch
          %215 = sbr.rel (%p213) target = $region32
        $region31: #{tpu_custom_call.1} parent=27 // pred_region
          %s216 = sadd.s32 %s22, %s24
          %s217 = smul.u32 2, %s216
          %p218 = scmp.lt.s32.totalorder %s23, 1
          %s219 = scalar_select %p218, %s23, 1
          %p220 = scmp.lt.s32.totalorder %s217, 1
          %s221 = scalar_select %p220, %s217, 1
          %s222 = smul.addr %s219, 2
          %s223 = sadd.s32 %s221, %s222
          %s224 = smul.addr %s223, 4
          %s225 = scalar_lea.vmem %s0, %s224
          %s226 = sadd.s32 %s22, %s24
          %s227 = smul.u32 2, %s226
        $region32: #{tpu_custom_call.1} parent=27 // pred_fallthru
          _
      $region28: #{tpu_custom_call.1} parent=5 // pred_fallthru
        _
      %p228 = scmp.le.s32.totalorder 1, %s15
      %p229 = scmp.lt.s32.totalorder %s15, 3
      %p230 = pnand %p228, %p229
      %p231 = pneg %p230
      // Predicated region
      $region33: #{tpu_custom_call.1} parent=5 // pred_check
        _
      $region34: #{tpu_custom_call.1} parent=5 // pred_check_branch
        %233 = sbr.rel (%p230) target = $region36
      $region35: #{tpu_custom_call.1} parent=5 // pred_region
        %s234 = ssub.s32 %s15, 1
        %s235 = sadd.s32 %s25, %s27
        %s236 = smul.u32 2, %s235
        %p237 = scmp.lt.s32.totalorder %s26, 1
        %s238 = scalar_select %p237, %s26, 1
        %p239 = scmp.lt.s32.totalorder %s236, 1
        %s240 = scalar_select %p239, %s236, 1
        %s241 = smul.addr %s238, 2
        %s242 = sadd.s32 %s240, %s241
        %s243 = smul.addr %s242, 4
        %s244 = scalar_lea.vmem %s0, %s243
        %p245 = pneg %p64
        %p246 = pneg %p61
        %p247 = pneg %p85
        %p248 = pneg %p82
        %p249 = pneg %p106
        %p250 = pneg %p103
        %p251 = pneg %p127
        %p252 = pneg %p124
        %p253 = pneg %p157
        %p254 = pneg %p154
        %s255 = sand.u32 %s144, 1
        %s256 = scalar_lea.sflag [#allocation3], %s255
        %s257 = sand.u32 %s144, 1
        %s258 = smul.addr %s257, 64
        %s259 = scalar_lea.vmem [#allocation2], %s258
        %p260 = pneg %p185
        %p261 = pneg %p182
        %p262 = scmp.lt.s32.totalorder %s25, 0
        %s263 = scalar_select %p262, %s25, 0
        %p264 = scmp.lt.s32.totalorder %s26, 1
        %s265 = scalar_select %p264, %s26, 1
        %s266 = smul.addr %s263, 2
        %s267 = sadd.s32 %s265, %s266
        %s268 = smul.addr %s267, 8
        %s269 = scalar_lea.vmem %s5, %s268
        %s270 = sadd.s32 %s25, %s27
        %s271 = smul.u32 2, %s270
        %p272 = scmp.lt.s32.totalorder %s26, 1
        %s273 = scalar_select %p272, %s26, 1
        %p274 = scmp.lt.s32.totalorder %s271, 1
        %s275 = scalar_select %p274, %s271, 1
        %s276 = smul.addr %s273, 2
        %s277 = sadd.s32 %s275, %s276
        %s278 = smul.addr %s277, 4
        %s279 = scalar_lea.vmem %s0, %s278
        %s280 = sadd.s32 %s25, %s27
        %s281 = smul.u32 2, %s280
        %s282 = sadd.s32 %s25, %s27
        %s283 = smul.u32 2, %s282
        %p284 = scmp.lt.s32.totalorder %s25, 0
        %s285 = scalar_select %p284, %s25, 0
        %p286 = scmp.lt.s32.totalorder %s26, 1
        %s287 = scalar_select %p286, %s26, 1
        %s288 = smul.addr %s285, 2
        %s289 = sadd.s32 %s287, %s288
        %s290 = smul.addr %s289, 8
        %s291 = scalar_lea.vmem %s5, %s290
        %v292 = vld [vmem:[%s1] sm:$0xff]
        %v293 = vld [vmem:[%s1 + $0x8] sm:$0xff]
        %v294 = vld [vmem:[%s1 + $0x10] sm:$0xff]
        %v295 = vld [vmem:[%s1 + $0x18] sm:$0xff]
        %v296 = vld [vmem:[%s279] sm:$0xff]
        %v297 = vld [vmem:[%s2] sm:$0xff]
        %v298 = vld [vmem:[%s2 + $0x8] sm:$0xff]
        %v299 = vld [vmem:[%s2 + $0x10] sm:$0xff]
        %v300 = vld [vmem:[%s2 + $0x18] sm:$0xff]
        %302 = vset.pattern.permute.xlu0 0
        %303 = vperm.xlu0 %302, %v297
        %v304 = vpop.permute.xlu0 %303
        %307 = vset.pattern.permute.xlu0 0
        %308 = vperm.xlu0 %307, %v298
        %v309 = vpop.permute.xlu0 %308
        %312 = vset.pattern.permute.xlu0 0
        %313 = vperm.xlu0 %312, %v299
        %v314 = vpop.permute.xlu0 %313
        %317 = vset.pattern.permute.xlu0 0
        %318 = vperm.xlu0 %317, %v300
        %v319 = vpop.permute.xlu0 %318
        %v322 = vcombine.high %v296, %v296
        %vm323 = vcmask 31744
        %v325 = vsel %vm323, %v292, 0
        %v328 = vsel %vm323, %v293, 0
        %v331 = vsel %vm323, %v294, 0
        %v334 = vsel %vm323, %v295, 0
        %vm336 = vcmask 1043456
        %v337 = vsel %vm336, %v296, 0
        %v339 = vsel %vm336, %v322, 0
        %341 = vmatprep.subr.mxu0 %v339
        %342 = vmatpush1.msra.mxu0 %v337
        %343 = vmatprep.subr.mxu0 0.0
        %344 = vmatpush1.msra.mxu0 0.0
        %345 = vmatprep.subr.mxu0 0.0
        %346 = vmatpush1.msra.mxu0 0.0
        %347 = vmatprep.subr.mxu0 0.0
        %348 = vmatpush1.msra.mxu0 0.0
        %349 = vmatprep.subr.mxu0 0.0
        %350 = vmatpush1.msra.mxu0 0.0
        %351 = vmatprep.subr.mxu0 0.0
        %352 = vmatpush1.msra.mxu0 0.0
        %353 = vmatprep.subr.mxu0 0.0
        %354 = vmatpush1.msra.mxu0 0.0
        %355 = vmatprep.subr.mxu0 0.0
        %356 = vmatpush1.msra.mxu0 0.0
        %357 = vmatprep.subr.mxu0 0.0
        %358 = vmatpush1.msra.mxu0 0.0
        %359 = vmatprep.subr.mxu0 0.0
        %360 = vmatpush1.msra.mxu0 0.0
        %361 = vmatprep.subr.mxu0 0.0
        %362 = vmatpush1.msra.mxu0 0.0
        %363 = vmatprep.subr.mxu0 0.0
        %364 = vmatpush1.msra.mxu0 0.0
        %365 = vmatprep.subr.mxu0 0.0
        %366 = vmatpush1.msra.mxu0 0.0
        %367 = vmatprep.subr.mxu0 0.0
        %368 = vmatpush1.msra.mxu0 0.0
        %369 = vmatprep.subr.mxu0 0.0
        %370 = vmatpush1.msra.mxu0 0.0
        %371 = vmatprep.subr.mxu0 0.0
        %372 = vmatpush1.msra.mxu0 0.0
        %373 = vmatprep.subr.mxu0 0.0
        %374 = vmatpush1.msra.mxu0 0.0
        %375 = vmatprep.subr.mxu0 0.0
        %376 = vmatpush1.msra.mxu0 0.0
        %377 = vmatprep.subr.mxu0 0.0
        %378 = vmatpush1.msra.mxu0 0.0
        %379 = vmatprep.subr.mxu0 0.0
        %380 = vmatpush1.msra.mxu0 0.0
        %381 = vmatprep.subr.mxu0 0.0
        %382 = vmatpush1.msra.mxu0 0.0
        %383 = vmatprep.subr.mxu0 0.0
        %384 = vmatpush1.msra.mxu0 0.0
        %385 = vmatprep.subr.mxu0 0.0
        %386 = vmatpush1.msra.mxu0 0.0
        %387 = vmatprep.subr.mxu0 0.0
        %388 = vmatpush1.msra.mxu0 0.0
        %389 = vmatprep.subr.mxu0 0.0
        %390 = vmatpush1.msra.mxu0 0.0
        %391 = vmatprep.subr.mxu0 0.0
        %392 = vmatpush1.msra.mxu0 0.0
        %393 = vmatprep.subr.mxu0 0.0
        %394 = vmatpush1.msra.mxu0 0.0
        %395 = vmatprep.subr.mxu0 0.0
        %396 = vmatpush1.msra.mxu0 0.0
        %397 = vmatprep.subr.mxu0 0.0
        %398 = vmatpush1.msra.mxu0 0.0
        %399 = vmatprep.subr.mxu0 0.0
        %400 = vmatpush1.msra.mxu0 0.0
        %401 = vmatprep.subr.mxu0 0.0
        %402 = vmatpush1.msra.mxu0 0.0
        %403 = vmatprep.subr.mxu0 0.0
        %404 = vmatpush1.msra.mxu0 0.0
        %405 = vmatprep.mubr.f32.mxu0 0.0
        %406 = vmatmul.mubr.f32.gmra.mrb[0].mxu0 %v325
        %v407 = vpop.f32.mrb[0].mxu0
        %v408 = vadd.f32 %v304, %v407
        %v409 = vpop.f32.mrb[0].mxu0
        %v410 = vadd.f32 %v304, %v409
        %411 = vmatprep.mubr.f32.mxu0 0.0
        %412 = vmatmul.mubr.f32.gmra.mrb[0].mxu0 %v328
        %v413 = vpop.f32.mrb[0].mxu0
        %v414 = vadd.f32 %v309, %v413
        %v415 = vpop.f32.mrb[0].mxu0
        %v416 = vadd.f32 %v309, %v415
        %417 = vmatprep.mubr.f32.mxu0 0.0
        %418 = vmatmul.mubr.f32.gmra.mrb[0].mxu0 %v331
        %v419 = vpop.f32.mrb[0].mxu0
        %v420 = vadd.f32 %v314, %v419
        %v421 = vpop.f32.mrb[0].mxu0
        %v422 = vadd.f32 %v314, %v421
        %423 = vmatprep.mubr.f32.mxu0 0.0
        %424 = vmatmul.mubr.f32.gmra.mrb[0].mxu0 %v334
        %v425 = vpop.f32.mrb[0].mxu0
        %v426 = vadd.f32 %v319, %v425
        %v427 = vpop.f32.mrb[0].mxu0
        %v428 = vadd.f32 %v319, %v427
        %429 = vdwg.mxu0
        %v430 = vmax.f32 %v408, 0.0
        %v431 = vmax.f32 %v410, 0.0
        %v432 = vmax.f32 %v414, 0.0
        %v433 = vmax.f32 %v416, 0.0
        %v434 = vmax.f32 %v420, 0.0
        %v435 = vmax.f32 %v422, 0.0
        %v436 = vmax.f32 %v426, 0.0
        %v437 = vmax.f32 %v428, 0.0
        %438 = vst [vmem:[%s259] sm:$0xff] %v430
        %439 = vst [vmem:[%s259 + $0x8] sm:$0xff] %v431
        %440 = vst [vmem:[%s259 + $0x10] sm:$0xff] %v432
        %441 = vst [vmem:[%s259 + $0x18] sm:$0xff] %v433
        %442 = vst [vmem:[%s259 + $0x20] sm:$0xff] %v434
        %443 = vst [vmem:[%s259 + $0x28] sm:$0xff] %v435
        %444 = vst [vmem:[%s259 + $0x30] sm:$0xff] %v436
        %445 = vst [vmem:[%s259 + $0x38] sm:$0xff] %v437
        %v446 = vld [vmem:[%s3] sm:$0x1f]
        %vm447 = vcmask 261120
        %v449 = vsel %vm447, %v446, 0
        %451 = vmatprep.subr.mxu0 %v431
        %452 = vmatpush1.msra.mxu0 %v430
        %453 = vmatprep.subr.mxu0 %v433
        %454 = vmatpush1.msra.mxu0 %v432
        %455 = vmatprep.subr.mxu0 %v435
        %456 = vmatpush1.msra.mxu0 %v434
        %457 = vmatprep.subr.mxu0 %v437
        %458 = vmatpush1.msra.mxu0 %v436
        %459 = vmatprep.subr.mxu0 0.0
        %460 = vmatpush1.msra.mxu0 0.0
        %461 = vmatprep.subr.mxu0 0.0
        %462 = vmatpush1.msra.mxu0 0.0
        %463 = vmatprep.subr.mxu0 0.0
        %464 = vmatpush1.msra.mxu0 0.0
        %465 = vmatprep.subr.mxu0 0.0
        %466 = vmatpush1.msra.mxu0 0.0
        %467 = vmatprep.subr.mxu0 0.0
        %468 = vmatpush1.msra.mxu0 0.0
        %469 = vmatprep.subr.mxu0 0.0
        %470 = vmatpush1.msra.mxu0 0.0
        %471 = vmatprep.subr.mxu0 0.0
        %472 = vmatpush1.msra.mxu0 0.0
        %473 = vmatprep.subr.mxu0 0.0
        %474 = vmatpush1.msra.mxu0 0.0
        %475 = vmatprep.subr.mxu0 0.0
        %476 = vmatpush1.msra.mxu0 0.0
        %477 = vmatprep.subr.mxu0 0.0
        %478 = vmatpush1.msra.mxu0 0.0
        %479 = vmatprep.subr.mxu0 0.0
        %480 = vmatpush1.msra.mxu0 0.0
        %481 = vmatprep.subr.mxu0 0.0
        %482 = vmatpush1.msra.mxu0 0.0
        %483 = vmatprep.subr.mxu0 0.0
        %484 = vmatpush1.msra.mxu0 0.0
        %485 = vmatprep.subr.mxu0 0.0
        %486 = vmatpush1.msra.mxu0 0.0
        %487 = vmatprep.subr.mxu0 0.0
        %488 = vmatpush1.msra.mxu0 0.0
        %489 = vmatprep.subr.mxu0 0.0
        %490 = vmatpush1.msra.mxu0 0.0
        %491 = vmatprep.subr.mxu0 0.0
        %492 = vmatpush1.msra.mxu0 0.0
        %493 = vmatprep.subr.mxu0 0.0
        %494 = vmatpush1.msra.mxu0 0.0
        %495 = vmatprep.subr.mxu0 0.0
        %496 = vmatpush1.msra.mxu0 0.0
        %497 = vmatprep.subr.mxu0 0.0
        %498 = vmatpush1.msra.mxu0 0.0
        %499 = vmatprep.subr.mxu0 0.0
        %500 = vmatpush1.msra.mxu0 0.0
        %501 = vmatprep.subr.mxu0 0.0
        %502 = vmatpush1.msra.mxu0 0.0
        %503 = vmatprep.subr.mxu0 0.0
        %504 = vmatpush1.msra.mxu0 0.0
        %505 = vmatprep.subr.mxu0 0.0
        %506 = vmatpush1.msra.mxu0 0.0
        %507 = vmatprep.subr.mxu0 0.0
        %508 = vmatpush1.msra.mxu0 0.0
        %509 = vmatprep.subr.mxu0 0.0
        %510 = vmatpush1.msra.mxu0 0.0
        %511 = vmatprep.subr.mxu0 0.0
        %512 = vmatpush1.msra.mxu0 0.0
        %513 = vmatprep.subr.mxu0 0.0
        %514 = vmatpush1.msra.mxu0 0.0
        %515 = vmatprep.mubr.f32.mxu0 0.0
        %516 = vmatmul.mubr.f32.gmra.mrb[0].mxu0 %v449
        %v517 = vpop.f32.mrb[0].mxu0
        %v518 = vadd.f32 0.0, %v517
        %v519 = vpop.f32.mrb[0].mxu0
        %v520 = vadd.f32 0.0, %v519
        %521 = vdwg.mxu0
        %vm522 = vcmask 1044480
        %v523 = vsel %vm522, %v518, 0.0
        %v524 = vsel %vm522, %v520, 0.0
        %v525 = vadd.f32 %v523, %v524
        %526 = vadd.xlane.f32.xlu0 %v525
        %v527 = vpop.xlane.xlu0 %526
        %p528 = scmp.eq.s32.totalorder %s27, 0
        // Predicated region
        $region37: #{tpu_custom_call.1} parent=35 // pred_check
          %p529 = pneg %p528
        $region38: #{tpu_custom_call.1} parent=35 // pred_check_branch
          %531 = sbr.rel (%p529) target = $region40
        $region39: #{tpu_custom_call.1} parent=35 // pred_region
          %vm532 = vcmask 4096
          %533 = vst.msk [vmem:[%s291] sm:$0x1f] %vm532, 0.0
        $region40: #{tpu_custom_call.1} parent=35 // pred_fallthru
          _
        %v534 = vld [vmem:[%s291] sm:$0x1f]
        %v535 = vadd.f32 %v534, %v527
        %vm536 = vcmask 4096
        %537 = vst.msk [vmem:[%s291] sm:$0x1f] %vm536, %v535
        %s538 = sand.u32 %s144, 1
        %s539 = scalar_lea.sflag [#allocation3], %s538
        %s540 = sand.u32 %s144, 1
        %s541 = smul.addr %s540, 64
        %s542 = scalar_lea.vmem [#allocation2], %s541
        %p543 = scmp.lt.s32.totalorder %s25, 0
        %s544 = scalar_select %p543, %s25, 0
        %p545 = scmp.lt.s32.totalorder %s26, 1
        %s546 = scalar_select %p545, %s26, 1
        %s547 = smul.addr %s544, 2
        %s548 = sadd.s32 %s546, %s547
        %s549 = smul.addr %s548, 8
        %s550 = scalar_lea.vmem %s5, %s549
        // Predicated region
        $region41: #{tpu_custom_call.1} parent=35 // pred_check
          %p551 = pneg %p154
        $region42: #{tpu_custom_call.1} parent=35 // pred_check_branch
          %553 = sbr.rel (%p551) target = $region44
        $region43: #{tpu_custom_call.1} parent=35 // pred_region
          %s554 = sadd.s32 %s25, %s27
          %s555 = smul.u32 2, %s554
          %s557 = ssub.s32 1024, 1024
          %558 = vsyncadd %s539, %s557
          %s559 = smul.addr %s26, 8
          %s560 = sadd.s32 %s555, %s559
          %s561 = smul.addr %s560, 128
          %s562 = scalar_lea.hbm %s4, %s561
          %s563 = sshll.u32 %s542, 4
          %s564 = int_to_ptr.vmem [resolvable:$true] %s563
          %569 = dma.vmem_to_hbm [thread:$0]  %s564, 1024, %s562, %s539, 256, 256, 16
        $region44: #{tpu_custom_call.1} parent=35 // pred_fallthru
          _
        // Predicated region
        $region45: #{tpu_custom_call.1} parent=35 // pred_check
          %p570 = pneg %p182
        $region46: #{tpu_custom_call.1} parent=35 // pred_check_branch
          %572 = sbr.rel (%p570) target = $region48
        $region47: #{tpu_custom_call.1} parent=35 // pred_region
          _
        $region48: #{tpu_custom_call.1} parent=35 // pred_fallthru
          _
      $region36: #{tpu_custom_call.1} parent=5 // pred_fallthru
        _
      %p573 = scmp.le.s32.totalorder 2, %s15
      // Predicated region
      $region49: #{tpu_custom_call.1} parent=5 // pred_check
        %p574 = pneg %p573
      $region50: #{tpu_custom_call.1} parent=5 // pred_check_branch
        %576 = sbr.rel (%p574) target = $region52
      $region51: #{tpu_custom_call.1} parent=5 // pred_region
        %s577 = ssub.s32 %s15, 2
        // Predicated region
        $region53: #{tpu_custom_call.1} parent=51 // pred_check
          %p578 = pneg %p160
        $region54: #{tpu_custom_call.1} parent=51 // pred_check_branch
          %580 = sbr.rel (%p578) target = $region56
        $region55: #{tpu_custom_call.1} parent=51 // pred_region
          %s581 = sand.u32 %s145, 1
          %s582 = scalar_lea.sflag [#allocation3], %s581
          %s583 = sand.u32 %s145, 1
          %s584 = smul.addr %s583, 64
          %s585 = scalar_lea.vmem [#allocation2], %s584
          %586 = dma.done %s582, 1024
        $region56: #{tpu_custom_call.1} parent=51 // pred_fallthru
          _
        // Predicated region
        $region57: #{tpu_custom_call.1} parent=51 // pred_check
          %p587 = pneg %p188
        $region58: #{tpu_custom_call.1} parent=51 // pred_check_branch
          %589 = sbr.rel (%p587) target = $region60
        $region59: #{tpu_custom_call.1} parent=51 // pred_region
          %p590 = scmp.lt.s32.totalorder %s28, 0
          %s591 = scalar_select %p590, %s28, 0
          %p592 = scmp.lt.s32.totalorder %s29, 1
          %s593 = scalar_select %p592, %s29, 1
          %s594 = smul.addr %s591, 2
          %s595 = sadd.s32 %s593, %s594
          %s596 = smul.addr %s595, 8
          %s597 = scalar_lea.vmem %s5, %s596
        $region60: #{tpu_custom_call.1} parent=51 // pred_fallthru
          _
      $region52: #{tpu_custom_call.1} parent=5 // pred_fallthru
        _
    $region6: #{tpu_custom_call.1} parent=1 // loop_footer
      %s19 = sadd.s32 1, %s15
    $region7: #{tpu_custom_call.1} parent=1 // loop_footer_branch
      %14 = sbr.rel target = $region3
    $region8: #{tpu_custom_call.1} parent=1 // loop_exit
      _
    %598 = vsyncpa [#allocation3], 1
    %s599 = scalar_lea.sflag [#allocation3], 1
    %600 = vsyncpa %s599, 1

</llo_original>
